<compile_context>
chip_gen: v7x
topology: tpu7x:2x2x1
jax: 0.10.0
libtpu: 0.0.40
codegen_flags: <defaults>
</compile_context>

<pallas_src>
import jax
import jax.numpy as jnp
import numpy as np
from jax.experimental import pallas as pl
from jax.experimental.pallas import tpu as pltpu


_LANE = 128                      # lane width
_SUBLANE_U8 = 32                 # uint8 sublane tile (8 sublanes x 4-byte packing)
_SINGLE_BLOCK_BYTES = 2 << 20    # inputs up to this size: one block, one grid step
_TARGET_BLOCK_BYTES = 2 << 20    # otherwise aim for ~2 MiB per block


# -----------------------------------------------------------------------------
# Kernel: packed uint8 AND against a small resident mask tile.
# -----------------------------------------------------------------------------
def _mask_kernel(img_ref, mask_ref, out_ref):
    m = mask_ref[...]                              # (32, hw) uint8, 0x00/0xFF, resident
    rows = img_ref.shape[0]                        # static (block_rows), multiple of 32
    for r0 in range(0, rows, _SUBLANE_U8):         # unrolled same-shape slab ANDs
        sl = slice(r0, r0 + _SUBLANE_U8)
        out_ref[sl, :] = img_ref[sl, :] & m


# -----------------------------------------------------------------------------
# Host-side static mask construction (mirrors the PyTorch module exactly).
# -----------------------------------------------------------------------------
def _build_keep_mask(h, w, ratio, square_ratio):
    """Returns (h, w) uint8 array of 0/1 matching the torch mask construction."""
    n = int(h * ratio)
    square_n = int(h * square_ratio)
    assert n <= w and square_n <= w, "mask corners derived from h must fit in w"
    keep = np.ones((h, w), dtype=np.uint8)
    if square_n > 0:
        keep[-square_n:, :square_n] = 0                       # bottom-left square
    if n > 0:
        tri = np.triu(np.ones((n, n), dtype=np.uint8))
        keep[-n:, -n:] = np.rot90(tri, 1)                     # tf.rotate(.., 90)  (CCW)
        keep[:n, -n:] = np.rot90(tri, 2)                      # tf.rotate(.., 180)
        keep[:n, :n] = np.rot90(tri, 3)                       # tf.rotate(.., 270)
    return keep


def _choose_block_rows(rows32, row_bytes):
    """rows32: row count already padded to a multiple of 32.  Returns a
    multiple-of-32 block row count sized by bytes (not rows)."""
    total_bytes = rows32 * row_bytes
    if total_bytes <= _SINGLE_BLOCK_BYTES:
        return rows32                                          # single block, grid=(1,)
    br = (_TARGET_BLOCK_BYTES // row_bytes) // _SUBLANE_U8 * _SUBLANE_U8
    br = max(_SUBLANE_U8, br)
    return min(br, rows32)


# -----------------------------------------------------------------------------
# Wrapper
# -----------------------------------------------------------------------------
def mask_forward(imgs, ratio=0.2, square_ratio=0.32):
    """imgs: uint8 array of shape (B, c, h, w) or (c, h, w).
    Returns masked uint8 images with the same shape."""
    squeeze = imgs.ndim == 3
    if squeeze:
        imgs = imgs[None]
    if imgs.dtype != jnp.uint8:
        raise ValueError("Mask expects uint8 images (PILToTensor output)")

    B, c, h, w = imgs.shape
    hw = h * w
    rows = B * c

    # Lane-dense geometry: pad lanes to a multiple of 128, rows to a multiple of
    # the uint8 sublane tile and of the chosen block row count.
    hw_pad = pl.cdiv(hw, _LANE) * _LANE
    rows32 = pl.cdiv(rows, _SUBLANE_U8) * _SUBLANE_U8
    block_rows = _choose_block_rows(rows32, hw_pad)
    padded_rows = pl.cdiv(rows32, block_rows) * block_rows
    grid = (padded_rows // block_rows,)

    # Static 0x00/0xFF mask row, tiled to one 32-row (sublane-tile) slab.
    keep_row = _build_keep_mask(h, w, ratio, square_ratio).reshape(1, hw)
    mask_row = (keep_row * np.uint8(0xFF)).astype(np.uint8)
    if hw_pad != hw:
        mask_row = np.pad(mask_row, ((0, 0), (0, hw_pad - hw)))
    mask_tile = jnp.asarray(
        np.ascontiguousarray(np.broadcast_to(mask_row, (_SUBLANE_U8, hw_pad))))

    # Flatten + zero-pad the images (zeros are harmless for a masking op).
    img_flat = imgs.reshape(rows, hw)
    pad_r, pad_c = padded_rows - rows, hw_pad - hw
    if pad_r or pad_c:
        img_flat = jnp.pad(img_flat, ((0, pad_r), (0, pad_c)))

    out_flat = pl.pallas_call(
        _mask_kernel,
        out_shape=jax.ShapeDtypeStruct((padded_rows, hw_pad), jnp.uint8),
        grid=grid,
        in_specs=[
            pl.BlockSpec((block_rows, hw_pad), lambda i: (i, 0)),     # image chunk
            pl.BlockSpec((_SUBLANE_U8, hw_pad), lambda i: (0, 0)),    # resident mask tile
        ],
        out_specs=pl.BlockSpec((block_rows, hw_pad), lambda i: (i, 0)),
        compiler_params=pltpu.CompilerParams(
            dimension_semantics=("parallel",)),
        cost_estimate=pl.CostEstimate(
            flops=0,
            transcendentals=0,
            bytes_accessed=2 * padded_rows * hw_pad + _SUBLANE_U8 * hw_pad),
    )(img_flat, mask_tile)

    out = out_flat[:rows, :hw].reshape(B, c, h, w)
    return out[0] if squeeze else out


# -----------------------------------------------------------------------------
# NumPy reference mirroring the PyTorch module (rot90 for tf.rotate).
# -----------------------------------------------------------------------------
def _reference_mask_forward(img_np, ratio=0.2, square_ratio=0.32):
    c, h, w = img_np.shape
    keep = _build_keep_mask(h, w, ratio, square_ratio)
    return (img_np * keep[None]).astype(np.uint8)


if __name__ == "__main__":
    key = jax.random.PRNGKey(0)
    k1, k2 = jax.random.split(key)

    # Case 1: small batch; B*c = 24 is NOT a multiple of 32 -> exercises row padding.
    B, c, h, w = 8, 3, 32, 32
    imgs = jax.random.randint(k1, (B, c, h, w), 0, 256, dtype=jnp.int32).astype(jnp.uint8)
    out = jax.block_until_ready(mask_forward(imgs))
    imgs_np, out_np = np.asarray(imgs), np.asarray(out)
    for b in range(B):
        np.testing.assert_array_equal(out_np[b], _reference_mask_forward(imgs_np[b]))

    # Case 2: single-image (c, h, w) path.
    out1 = jax.block_until_ready(mask_forward(imgs[0]))
    np.testing.assert_array_equal(np.asarray(out1), _reference_mask_forward(imgs_np[0]))

    # Case 3: larger batch -> multi-block pipelined grid (block_rows=2048, grid=(2,)).
    B2 = 1024
    imgs2 = jax.random.randint(k2, (B2, c, h, w), 0, 256, dtype=jnp.int32).astype(jnp.uint8)
    out2 = jax.block_until_ready(mask_forward(imgs2))
    imgs2_np, out2_np = np.asarray(imgs2), np.asarray(out2)
    for b in (0, 511, 1023):
        np.testing.assert_array_equal(out2_np[b], _reference_mask_forward(imgs2_np[b]))

    print("KERNEL_OK")
</pallas_src>

<mosaic_0001>
module attributes {stable_mosaic.version = 11 : i64} {
  func.func @_mask_kernel(%arg0: i32, %arg1: memref<32x1024xi8, #tpu.memory_space<vmem>>, %arg2: memref<32x1024xi8, #tpu.memory_space<vmem>>, %arg3: memref<32x1024xi8, #tpu.memory_space<vmem>>) attributes {dimension_semantics = [#tpu.dimension_semantics<parallel>], iteration_bounds = array<i64: 1>, scalar_prefetch = 0 : i64, scratch_operands = 0 : i64, tpu.core_type = #tpu.core_type<tc>, window_params = [{transform_indices = @transform_0, window_bounds = array<i64: 32, 1024>}, {pipeline_mode = #tpu.pipeline_mode<synchronous>, transform_indices = @transform_1, window_bounds = array<i64: 32, 1024>}, {transform_indices = @transform_2, window_bounds = array<i64: 32, 1024>}]} {
    %c0 = arith.constant 0 : index
    %c0_0 = arith.constant 0 : index
    %0 = vector.load %arg2[%c0, %c0_0] : memref<32x1024xi8, #tpu.memory_space<vmem>>, vector<32x1024xi8>
    %c0_1 = arith.constant 0 : index
    %c0_2 = arith.constant 0 : index
    %1 = vector.load %arg1[%c0_1, %c0_2] : memref<32x1024xi8, #tpu.memory_space<vmem>>, vector<32x1024xi8>
    %2 = arith.andi %1, %0 : vector<32x1024xi8>
    %c0_3 = arith.constant 0 : index
    %c0_4 = arith.constant 0 : index
    %3 = vector.load %arg3[%c0_3, %c0_4] : memref<32x1024xi8, #tpu.memory_space<vmem>>, vector<32x1024xi8>
    tpu.vector_store %arg3[%c0_3, %c0_4], %2 {strides = array<i32>} : memref<32x1024xi8, #tpu.memory_space<vmem>>, vector<32x1024xi8>,
    return
  }
  func.func @transform_0(%arg0: i32) -> (i32, i32) {
    %c0_i32 = arith.constant 0 : i32
    %c0_i32_0 = arith.constant 0 : i32
    return %arg0, %c0_i32 : i32, i32
  }
  func.func @transform_1(%arg0: i32) -> (i32, i32) {
    %c0_i32 = arith.constant 0 : i32
    %c0_i32_0 = arith.constant 0 : i32
    %c0_i32_1 = arith.constant 0 : i32
    return %c0_i32, %c0_i32_0 : i32, i32
  }
  func.func @transform_2(%arg0: i32) -> (i32, i32) {
    %c0_i32 = arith.constant 0 : i32
    %c0_i32_0 = arith.constant 0 : i32
    return %arg0, %c0_i32 : i32, i32
  }
}

</mosaic_0001>

<llo_original>
// kernel: tpu_custom_call.1
$region0: #{tpu_custom_call.1}
  #allocation0 [shape = 'u32[]', space=smem, size = 0x4, offset = 0x4, fixed_abs, tag = 'smem constant byte address 0x4 - core index']
  #allocation1 [shape = 'u32[144,128]{1,0:T(1,128)}', space=vmem, size = 0x12000, scoped, tag = 'internal scratch']
  %s0 = inlined_call_operand.hbm [shape: u8[32,1024], index: 0, kind: input, shape index: {}]
  %s1 = inlined_call_operand.hbm [shape: u8[32,1024], index: 1, kind: input, shape index: {}]
  %s2 = inlined_call_operand.hbm [shape: u8[32,1024], index: 2, kind: output, shape index: {}]
  %s3 = sld [smem:[#allocation0]]
  $region26: #{tpu_custom_call.1} parent=0
    _
  %s5 = ssub.s32 1, %s3
  %s6 = scalar_select 0, %s5, %s3
  $region1: #{tpu_custom_call.1} parent=0
    #allocation2 [shape = 'u8[32768]{0}', space=vmem, size = 0x8000, scoped, tag = 'input window, operand 0, single buffered']
    #allocation3 [shape = 's32[1]{0}', space=sflag, size = 0x4, scoped, tag = 'scoped memory for tpu_custom_call.1']
    #allocation4 [shape = 's32[1]{0}', space=sflag, size = 0x4, scoped, tag = 'scoped memory for tpu_custom_call.1']
    #allocation5 [shape = 'u8[32768]{0}', space=vmem, size = 0x8000, scoped, tag = 'input window, operand 1, single buffered']
    #allocation6 [shape = 's32[1]{0}', space=sflag, size = 0x4, scoped, tag = 'scoped memory for tpu_custom_call.1']
    #allocation7 [shape = 'u8[32768]{0}', space=vmem, size = 0x8000, scoped, tag = 'output window, operand 0, single buffered']
    %7 = vsyncpa [#allocation3], 0
    %8 = vsyncpa [#allocation6], 0
    %9 = vsyncpa [#allocation4], 0
    // Predicated region
    $region2: #{tpu_custom_call.1} parent=1 // pred_check
      _
    $region3: #{tpu_custom_call.1} parent=1 // pred_check_branch
      %11 = sbr.rel (0) target = $region5
    $region4: #{tpu_custom_call.1} parent=1 // pred_region
      %s13 = ssub.s32 1024, 1024
      %14 = vsyncadd [#allocation3], %s13
      %s16 = sshll.u32 [#allocation2], 4
      %s17 = int_to_ptr.vmem [resolvable:$true] %s16
      %19 = dma.hbm_to_vmem [thread:$0]  %s0, 1024, %s17, [#allocation3]
    $region5: #{tpu_custom_call.1} parent=1 // pred_fallthru
      _
    // Predicated region
    $region6: #{tpu_custom_call.1} parent=1 // pred_check
      _
    $region7: #{tpu_custom_call.1} parent=1 // pred_check_branch
      %21 = sbr.rel (0) target = $region9
    $region8: #{tpu_custom_call.1} parent=1 // pred_region
      %s23 = ssub.s32 1024, 1024
      %24 = vsyncadd [#allocation6], %s23
      %s26 = sshll.u32 [#allocation5], 4
      %s27 = int_to_ptr.vmem [resolvable:$true] %s26
      %29 = dma.hbm_to_vmem [thread:$0]  %s1, 1024, %s27, [#allocation6]
    $region9: #{tpu_custom_call.1} parent=1 // pred_fallthru
      _
    // Predicated region
    $region10: #{tpu_custom_call.1} parent=1 // pred_check
      _
    $region11: #{tpu_custom_call.1} parent=1 // pred_check_branch
      %31 = sbr.rel (0) target = $region13
    $region12: #{tpu_custom_call.1} parent=1 // pred_region
      %32 = dma.done [#allocation3], 1024
    $region13: #{tpu_custom_call.1} parent=1 // pred_fallthru
      _
    // Predicated region
    $region14: #{tpu_custom_call.1} parent=1 // pred_check
      _
    $region15: #{tpu_custom_call.1} parent=1 // pred_check_branch
      %34 = sbr.rel (0) target = $region17
    $region16: #{tpu_custom_call.1} parent=1 // pred_region
      %35 = dma.done [#allocation6], 1024
    $region17: #{tpu_custom_call.1} parent=1 // pred_fallthru
      _
    %v36 = vld [vmem:[#allocation5] sm:$0xff]
    %v37 = vld [vmem:[#allocation5 + $0x8] sm:$0xff]
    %v38 = vld [vmem:[#allocation5 + $0x10] sm:$0xff]
    %v39 = vld [vmem:[#allocation5 + $0x18] sm:$0xff]
    %v40 = vld [vmem:[#allocation5 + $0x20] sm:$0xff]
    %v41 = vld [vmem:[#allocation5 + $0x28] sm:$0xff]
    %v42 = vld [vmem:[#allocation5 + $0x30] sm:$0xff]
    %v43 = vld [vmem:[#allocation5 + $0x38] sm:$0xff]
    %v44 = vld [vmem:[#allocation2] sm:$0xff]
    %v45 = vld [vmem:[#allocation2 + $0x8] sm:$0xff]
    %v46 = vld [vmem:[#allocation2 + $0x10] sm:$0xff]
    %v47 = vld [vmem:[#allocation2 + $0x18] sm:$0xff]
    %v48 = vld [vmem:[#allocation2 + $0x20] sm:$0xff]
    %v49 = vld [vmem:[#allocation2 + $0x28] sm:$0xff]
    %v50 = vld [vmem:[#allocation2 + $0x30] sm:$0xff]
    %v51 = vld [vmem:[#allocation2 + $0x38] sm:$0xff]
    %v52 = vand.u32 %v44, %v36
    %v53 = vand.u32 %v45, %v37
    %v54 = vand.u32 %v46, %v38
    %v55 = vand.u32 %v47, %v39
    %v56 = vand.u32 %v48, %v40
    %v57 = vand.u32 %v49, %v41
    %v58 = vand.u32 %v50, %v42
    %v59 = vand.u32 %v51, %v43
    %60 = vst [vmem:[#allocation7] sm:$0xff] %v52
    %61 = vst [vmem:[#allocation7 + $0x8] sm:$0xff] %v53
    %62 = vst [vmem:[#allocation7 + $0x10] sm:$0xff] %v54
    %63 = vst [vmem:[#allocation7 + $0x18] sm:$0xff] %v55
    %64 = vst [vmem:[#allocation7 + $0x20] sm:$0xff] %v56
    %65 = vst [vmem:[#allocation7 + $0x28] sm:$0xff] %v57
    %66 = vst [vmem:[#allocation7 + $0x30] sm:$0xff] %v58
    %67 = vst [vmem:[#allocation7 + $0x38] sm:$0xff] %v59
    // Predicated region
    $region18: #{tpu_custom_call.1} parent=1 // pred_check
      _
    $region19: #{tpu_custom_call.1} parent=1 // pred_check_branch
      %69 = sbr.rel (0) target = $region21
    $region20: #{tpu_custom_call.1} parent=1 // pred_region
      %s71 = ssub.s32 1024, 1024
      %72 = vsyncadd [#allocation4], %s71
      %s74 = sshll.u32 [#allocation7], 4
      %s75 = int_to_ptr.vmem [resolvable:$true] %s74
      %77 = dma.vmem_to_hbm [thread:$0]  %s75, 1024, %s2, [#allocation4]
    $region21: #{tpu_custom_call.1} parent=1 // pred_fallthru
      _
    // Predicated region
    $region22: #{tpu_custom_call.1} parent=1 // pred_check
      _
    $region23: #{tpu_custom_call.1} parent=1 // pred_check_branch
      %79 = sbr.rel (0) target = $region25
    $region24: #{tpu_custom_call.1} parent=1 // pred_region
      %80 = dma.done [#allocation4], 1024
    $region25: #{tpu_custom_call.1} parent=1 // pred_fallthru
      _
    %81 = vsyncpa [#allocation3], 1
    %82 = vsyncpa [#allocation6], 1
    %83 = vsyncpa [#allocation4], 1

</llo_original>
